<compile_context>
chip_gen: v7x
topology: tpu7x:2x2x1
jax: 0.10.0
libtpu: 0.0.40
codegen_flags: <defaults>
</compile_context>

<pallas_src>
import jax
import jax.numpy as jnp
from jax import lax
from jax.experimental import pallas as pl
from jax.experimental.pallas import tpu as pltpu

VOCAB_SIZE = 64
EMBED_DIM = 16
HIDDEN = 32
CONTEXT_SIZE = 3
OUT_DIM = CONTEXT_SIZE * VOCAB_SIZE   # 192 (not a multiple of 128)
OUT_PAD = 256                         # lane-dense padded logits width
TILE_B = 128                          # batch tile (sublane-aligned; >1 grid step lets v7x split)
NEG_INF = -1e30                       # mask value for the 64 padded logit columns


def skipgram_kernel(idx_ref, hid_ref, w2_ref, b2_ref, out_ref):
    """One batch tile of the forward pass.

    idx_ref : (TILE_B, 1)       int32  word indices for this tile
    hid_ref : (V, HIDDEN)       f32    precomputed relu(emb @ W1 + b1), resident
    w2_ref  : (HIDDEN, OUT_PAD) f32    linear2 weight, zero-padded 192 -> 256, resident
    b2_ref  : (1, OUT_PAD)      f32    linear2 bias, padded cols = -1e30, resident
    out_ref : (TILE_B, OUT_PAD) f32    log-probs (padded cols garbage, sliced in wrapper)
    """
    ids = idx_ref[...]                                                     # (TILE_B, 1) int32
    # Embedding-row gather expressed as a one-hot matmul (MXU-friendly, no gather op).
    onehot = (ids == lax.broadcasted_iota(jnp.int32, (TILE_B, VOCAB_SIZE), 1)
              ).astype(jnp.float32)                                        # (TILE_B, V)
    h = jnp.dot(onehot, hid_ref[...],
                preferred_element_type=jnp.float32)                        # (TILE_B, HIDDEN)

    # linear2 (padded to 256 output columns).
    logits = jnp.dot(h, w2_ref[...],
                     preferred_element_type=jnp.float32) + b2_ref[...]     # (TILE_B, 256)

    # log_softmax over the full row (dim=1 in the PyTorch module); the 64 padded
    # columns sit at -1e30, so exp underflows to 0 and they do not affect max/sum.
    m = jnp.max(logits, axis=-1, keepdims=True)
    z = logits - m
    lse = jnp.log(jnp.sum(jnp.exp(z), axis=-1, keepdims=True))
    out_ref[...] = z - lse


def skipgram_forward(idx, emb_table, w1, b1, w2, b2):
    """Batched forward: idx (B,) int32 -> (B, CONTEXT_SIZE, VOCAB_SIZE) log-probs."""
    idx = jnp.asarray(idx, jnp.int32).reshape(-1)
    B = idx.shape[0]
    V, _E = emb_table.shape

    # Fold embedding + linear1 + ReLU into a (V, 32) table once per weight set.
    hidden_table = jnp.maximum(emb_table @ w1 + b1, 0.0)                   # (64, 32), 8 KB

    # Lane-dense padding of linear2: zero weight cols + -1e30 bias cols.
    w2p = jnp.concatenate(
        [w2, jnp.zeros((HIDDEN, OUT_PAD - OUT_DIM), w2.dtype)], axis=1)    # (32, 256)
    b2p = jnp.concatenate(
        [b2, jnp.full((1, OUT_PAD - OUT_DIM), NEG_INF, b2.dtype)], axis=1)  # (1, 256)

    # Pad the batch up to a multiple of TILE_B (pad rows use index 0; sliced off below).
    Bp = max(TILE_B, ((B + TILE_B - 1) // TILE_B) * TILE_B)
    idx_p = jnp.pad(idx, (0, Bp - B)).reshape(Bp, 1)

    num_tiles = Bp // TILE_B
    out = pl.pallas_call(
        skipgram_kernel,
        out_shape=jax.ShapeDtypeStruct((Bp, OUT_PAD), jnp.float32),
        grid=(num_tiles,),
        in_specs=[
            pl.BlockSpec((TILE_B, 1), lambda i: (i, 0)),          # per-tile word indices
            pl.BlockSpec((V, HIDDEN), lambda i: (0, 0)),          # hidden table, resident
            pl.BlockSpec((HIDDEN, OUT_PAD), lambda i: (0, 0)),    # W2 (padded), resident
            pl.BlockSpec((1, OUT_PAD), lambda i: (0, 0)),         # b2 (padded), resident
        ],
        out_specs=pl.BlockSpec((TILE_B, OUT_PAD), lambda i: (i, 0)),
        compiler_params=pltpu.CompilerParams(
            dimension_semantics=("parallel",)),                   # v7x: shard tiles over 2 TCs
    )(idx_p, hidden_table, w2p, b2p)

    return out[:B, :OUT_DIM].reshape(B, CONTEXT_SIZE, VOCAB_SIZE)


def skipgram_forward_single(word_idx, emb_table, w1, b1, w2, b2):
    """Exactly the PyTorch module's forward: one index -> (CONTEXT_SIZE, VOCAB_SIZE)."""
    out = skipgram_forward(jnp.array([word_idx], jnp.int32), emb_table, w1, b1, w2, b2)
    return out[0]


def reference_forward(idx, emb_table, w1, b1, w2, b2):
    idx = jnp.asarray(idx, jnp.int32).reshape(-1)
    e = emb_table[idx]                                   # (B, E)
    h = jnp.maximum(e @ w1 + b1, 0.0)                    # (B, 32)
    logits = h @ w2 + b2                                 # (B, C*V)
    return jax.nn.log_softmax(logits, axis=-1).reshape(-1, CONTEXT_SIZE, VOCAB_SIZE)


if __name__ == "__main__":
    key = jax.random.PRNGKey(0)
    k_emb, k_w1, k_b1, k_w2, k_b2, k_idx = jax.random.split(key, 6)

    # Deterministic synthetic parameters (shapes follow the module's __init__).
    emb_table = jax.random.normal(k_emb, (VOCAB_SIZE, EMBED_DIM), jnp.float32) * 0.1
    w1 = jax.random.normal(k_w1, (EMBED_DIM, HIDDEN), jnp.float32) * 0.1    # linear1.weight.T
    b1 = jax.random.normal(k_b1, (1, HIDDEN), jnp.float32) * 0.1
    w2 = jax.random.normal(k_w2, (HIDDEN, OUT_DIM), jnp.float32) * 0.1      # linear2.weight.T
    b2 = jax.random.normal(k_b2, (1, OUT_DIM), jnp.float32) * 0.1

    # Batched path: 256 word indices -> grid=(2,) batch tiles.
    B = 256
    idx = jax.random.randint(k_idx, (B,), 0, VOCAB_SIZE, jnp.int32)

    log_probs = skipgram_forward(idx, emb_table, w1, b1, w2, b2)
    log_probs = jax.block_until_ready(log_probs)
    assert log_probs.shape == (B, CONTEXT_SIZE, VOCAB_SIZE)

    ref = reference_forward(idx, emb_table, w1, b1, w2, b2)
    assert jnp.allclose(log_probs, ref, atol=1e-5), "batched mismatch vs JAX reference"

    # Single-index path (what the module's predict() feeds to forward).
    single = skipgram_forward_single(7, emb_table, w1, b1, w2, b2)
    single = jax.block_until_ready(single)
    single_ref = reference_forward(jnp.array([7]), emb_table, w1, b1, w2, b2)[0]
    assert single.shape == (CONTEXT_SIZE, VOCAB_SIZE)
    assert jnp.allclose(single, single_ref, atol=1e-5), "single-index mismatch vs JAX reference"

    print("KERNEL_OK")
</pallas_src>

<mosaic_0001>
module attributes {stable_mosaic.version = 11 : i64} {
  func.func @skipgram_kernel(%arg0: i32, %arg1: memref<128x1xi32, #tpu.memory_space<vmem>>, %arg2: memref<64x32xf32, #tpu.memory_space<vmem>>, %arg3: memref<32x256xf32, #tpu.memory_space<vmem>>, %arg4: memref<1x256xf32, #tpu.memory_space<vmem>>, %arg5: memref<128x256xf32, #tpu.memory_space<vmem>>) attributes {dimension_semantics = [#tpu.dimension_semantics<parallel>], iteration_bounds = array<i64: 2>, scalar_prefetch = 0 : i64, scratch_operands = 0 : i64, tpu.core_type = #tpu.core_type<tc>, window_params = [{transform_indices = @transform_0, window_bounds = array<i64: 128, 1>}, {pipeline_mode = #tpu.pipeline_mode<synchronous>, transform_indices = @transform_1, window_bounds = array<i64: 64, 32>}, {pipeline_mode = #tpu.pipeline_mode<synchronous>, transform_indices = @transform_2, window_bounds = array<i64: 32, 256>}, {pipeline_mode = #tpu.pipeline_mode<synchronous>, transform_indices = @transform_3, window_bounds = array<i64: 1, 256>}, {transform_indices = @transform_4, window_bounds = array<i64: 128, 256>}]} {
    %c0 = arith.constant 0 : index
    %c0_0 = arith.constant 0 : index
    %0 = vector.load %arg1[%c0, %c0_0] : memref<128x1xi32, #tpu.memory_space<vmem>>, vector<128x1xi32>
    %1 = tpu.iota {dimensions = array<i32: 1>} : vector<128x64xi32>
    %2 = vector.broadcast %0 : vector<128x1xi32> to vector<128x64xi32>
    %3 = arith.cmpi eq, %2, %1 : vector<128x64xi32>
    %4 = arith.extui %3 : vector<128x64xi1> to vector<128x64xi32>
    %5 = arith.sitofp %4 : vector<128x64xi32> to vector<128x64xf32>
    %c0_1 = arith.constant 0 : index
    %c0_2 = arith.constant 0 : index
    %6 = vector.load %arg2[%c0_1, %c0_2] : memref<64x32xf32, #tpu.memory_space<vmem>>, vector<64x32xf32>
    %cst = arith.constant dense<0.000000e+00> : vector<128x32xf32>
    %7 = tpu.matmul %5, %6, %cst {dimension_numbers = #tpu.dot_dimension_numbers<[1], [0], [0], [1], [0, 0, 1, 1], [], []>} : vector<128x64xf32>, vector<64x32xf32>, vector<128x32xf32> -> vector<128x32xf32>
    %c0_3 = arith.constant 0 : index
    %c0_4 = arith.constant 0 : index
    %8 = vector.load %arg3[%c0_3, %c0_4] : memref<32x256xf32, #tpu.memory_space<vmem>>, vector<32x256xf32>
    %cst_5 = arith.constant dense<0.000000e+00> : vector<128x256xf32>
    %9 = tpu.matmul %7, %8, %cst_5 {dimension_numbers = #tpu.dot_dimension_numbers<[1], [0], [0], [1], [0, 0, 1, 1], [], []>} : vector<128x32xf32>, vector<32x256xf32>, vector<128x256xf32> -> vector<128x256xf32>
    %c0_6 = arith.constant 0 : index
    %c0_7 = arith.constant 0 : index
    %10 = vector.load %arg4[%c0_6, %c0_7] : memref<1x256xf32, #tpu.memory_space<vmem>>, vector<1x256xf32>
    %11 = vector.broadcast %10 : vector<1x256xf32> to vector<128x256xf32>
    %12 = arith.addf %9, %11 : vector<128x256xf32>
    %cst_8 = arith.constant dense<0xFF800000> : vector<128xf32>
    %13 = vector.multi_reduction <maximumf>, %12, %cst_8 [1] : vector<128x256xf32> to vector<128xf32>
    %14 = vector.shape_cast %13 : vector<128xf32> to vector<128x1xf32>
    %15 = vector.broadcast %14 : vector<128x1xf32> to vector<128x256xf32>
    %16 = arith.subf %12, %15 : vector<128x256xf32>
    %17 = math.exp %16 : vector<128x256xf32>
    %cst_9 = arith.constant dense<0.000000e+00> : vector<128xf32>
    %18 = vector.multi_reduction <add>, %17, %cst_9 [1] : vector<128x256xf32> to vector<128xf32>
    %19 = vector.shape_cast %18 : vector<128xf32> to vector<128x1xf32>
    %20 = math.log %19 : vector<128x1xf32>
    %21 = vector.broadcast %20 : vector<128x1xf32> to vector<128x256xf32>
    %22 = arith.subf %16, %21 : vector<128x256xf32>
    %c0_10 = arith.constant 0 : index
    %c0_11 = arith.constant 0 : index
    %23 = vector.load %arg5[%c0_10, %c0_11] : memref<128x256xf32, #tpu.memory_space<vmem>>, vector<128x256xf32>
    tpu.vector_store %arg5[%c0_10, %c0_11], %22 {strides = array<i32>} : memref<128x256xf32, #tpu.memory_space<vmem>>, vector<128x256xf32>,
    return
  }
  func.func @transform_0(%arg0: i32) -> (i32, i32) {
    %c0_i32 = arith.constant 0 : i32
    %c0_i32_0 = arith.constant 0 : i32
    return %arg0, %c0_i32 : i32, i32
  }
  func.func @transform_1(%arg0: i32) -> (i32, i32) {
    %c0_i32 = arith.constant 0 : i32
    %c0_i32_0 = arith.constant 0 : i32
    %c0_i32_1 = arith.constant 0 : i32
    return %c0_i32, %c0_i32_0 : i32, i32
  }
  func.func @transform_2(%arg0: i32) -> (i32, i32) {
    %c0_i32 = arith.constant 0 : i32
    %c0_i32_0 = arith.constant 0 : i32
    %c0_i32_1 = arith.constant 0 : i32
    return %c0_i32, %c0_i32_0 : i32, i32
  }
  func.func @transform_3(%arg0: i32) -> (i32, i32) {
    %c0_i32 = arith.constant 0 : i32
    %c0_i32_0 = arith.constant 0 : i32
    %c0_i32_1 = arith.constant 0 : i32
    return %c0_i32, %c0_i32_0 : i32, i32
  }
  func.func @transform_4(%arg0: i32) -> (i32, i32) {
    %c0_i32 = arith.constant 0 : i32
    %c0_i32_0 = arith.constant 0 : i32
    return %arg0, %c0_i32 : i32, i32
  }
}

</mosaic_0001>

<llo_original>
// kernel: tpu_custom_call.1
$region0: #{tpu_custom_call.1}
  #allocation0 [shape = 'u32[]', space=smem, size = 0x4, offset = 0x4, fixed_abs, tag = 'smem constant byte address 0x4 - core index']
  #allocation1 [shape = 'u32[144,128]{1,0:T(1,128)}', space=vmem, size = 0x12000, scoped, tag = 'internal scratch']
  %s0 = inlined_call_operand.vmem [shape: s32[256,1], index: 0, kind: input, shape index: {}]
  %s1 = inlined_call_operand.vmem [shape: f32[64,32], index: 1, kind: input, shape index: {}]
  %s2 = inlined_call_operand.vmem [shape: f32[32,256], index: 2, kind: input, shape index: {}]
  %s3 = inlined_call_operand.vmem [shape: f32[1,256], index: 3, kind: input, shape index: {}]
  %s4 = inlined_call_operand.hbm [shape: f32[256,256], index: 4, kind: output, shape index: {}]
  %s5 = sld [smem:[#allocation0]]
  $region49: #{tpu_custom_call.1} parent=0
    _
  %s7 = ssub.s32 1, %s5
  %s8 = scalar_select 0, %s7, %s5
  $region1: #{tpu_custom_call.1} parent=0
    #allocation2 [shape = 'u8[262144]{0}', space=vmem, size = 0x40000, scoped, tag = 'output window, operand 0']
    #allocation3 [shape = 's32[2]{0}', space=sflag, size = 0x8, scoped, tag = 'scoped memory for tpu_custom_call.1']
    %9 = vsyncpa [#allocation3], 0
    %s10 = scalar_lea.sflag [#allocation3], 1
    %11 = vsyncpa %s10, 0
    loop: start=0, step=1, limit=4
    $region2: #{tpu_custom_call.1} parent=1 // loop_pre_header
      _
    $region3: #{tpu_custom_call.1} parent=1 // loop_header
      %s13 = sphi 0, %s17
      %p14 = scmp.ge.s32.totalorder %s13, 4
      %s23 = sphi 0, %s25
      %s26 = sphi 0, %s23
      %s27 = sphi 0, %s26
      %s43 = sphi 0, %s27
      %s47 = sphi 0, %s47
      %s49 = sphi 0, %s47
      %s50 = sphi 0, %s49
      %s64 = sphi 0, %s50
      %s68 = sphi 0, %s68
      %s70 = sphi 0, %s68
      %s71 = sphi 0, %s70
      %s85 = sphi 0, %s71
      %s89 = sphi 0, %s89
      %s91 = sphi 0, %s89
      %s92 = sphi 0, %s91
      %s106 = sphi 0, %s92
      %s112 = sphi 0, %s114
      %s115 = sphi 0, %s112
      %s116 = sphi 0, %s115
      %s132 = sphi 0, %s116
    $region4: #{tpu_custom_call.1} parent=1 // loop_header_branch
      %16 = sbr.rel (%p14) target = $region8
    $region5: #{tpu_custom_call.1} parent=1 // loop_body
      %s18 = ssub.s32 %s13, 1
      %s19 = ssub.s32 %s13, 2
      %s20 = sadd.s32 %s13, 1
      %s21 = ssub.s32 %s13, %s20
      %p22 = scmp.eq.s32.totalorder %s21, 0
      %s24 = sadd.s32 %s23, 1
      %s25 = scalar_select %p22, %s23, %s24
      %p28 = pneg %p22
      %p29 = scmp.eq.s32.totalorder %s13, 1
      %p30 = por %p28, %p29
      %p31 = scmp.ne.s32.totalorder %s23, %s26
      %p32 = scmp.eq.s32.totalorder %s13, 0
      %p33 = por %p31, %p32
      %p34 = scmp.ne.s32.totalorder %s23, %s26
      %p35 = scmp.eq.s32.totalorder %s18, 1
      %p36 = por %p34, %p35
      %p37 = scmp.ne.s32.totalorder %s26, %s27
      %p38 = scmp.eq.s32.totalorder %s18, 0
      %p39 = por %p37, %p38
      %p40 = scmp.ne.s32.totalorder %s26, %s27
      %p41 = scmp.eq.s32.totalorder %s19, 1
      %p42 = por %p40, %p41
      %p44 = scmp.ne.s32.totalorder %s27, %s43
      %p45 = scmp.eq.s32.totalorder %s19, 0
      %p46 = por %p44, %p45
      %s48 = sadd.s32 %s47, 1
      %p51 = scmp.eq.s32.totalorder %s13, 1
      %p52 = scmp.ne.s32.totalorder %s47, %s49
      %p53 = scmp.eq.s32.totalorder %s13, 0
      %p54 = por %p52, %p53
      %p55 = scmp.ne.s32.totalorder %s47, %s49
      %p56 = scmp.eq.s32.totalorder %s18, 1
      %p57 = por %p55, %p56
      %p58 = scmp.ne.s32.totalorder %s49, %s50
      %p59 = scmp.eq.s32.totalorder %s18, 0
      %p60 = por %p58, %p59
      %p61 = scmp.ne.s32.totalorder %s49, %s50
      %p62 = scmp.eq.s32.totalorder %s19, 1
      %p63 = por %p61, %p62
      %p65 = scmp.ne.s32.totalorder %s50, %s64
      %p66 = scmp.eq.s32.totalorder %s19, 0
      %p67 = por %p65, %p66
      %s69 = sadd.s32 %s68, 1
      %p72 = scmp.eq.s32.totalorder %s13, 1
      %p73 = scmp.ne.s32.totalorder %s68, %s70
      %p74 = scmp.eq.s32.totalorder %s13, 0
      %p75 = por %p73, %p74
      %p76 = scmp.ne.s32.totalorder %s68, %s70
      %p77 = scmp.eq.s32.totalorder %s18, 1
      %p78 = por %p76, %p77
      %p79 = scmp.ne.s32.totalorder %s70, %s71
      %p80 = scmp.eq.s32.totalorder %s18, 0
      %p81 = por %p79, %p80
      %p82 = scmp.ne.s32.totalorder %s70, %s71
      %p83 = scmp.eq.s32.totalorder %s19, 1
      %p84 = por %p82, %p83
      %p86 = scmp.ne.s32.totalorder %s71, %s85
      %p87 = scmp.eq.s32.totalorder %s19, 0
      %p88 = por %p86, %p87
      %s90 = sadd.s32 %s89, 1
      %p93 = scmp.eq.s32.totalorder %s13, 1
      %p94 = scmp.ne.s32.totalorder %s89, %s91
      %p95 = scmp.eq.s32.totalorder %s13, 0
      %p96 = por %p94, %p95
      %p97 = scmp.ne.s32.totalorder %s89, %s91
      %p98 = scmp.eq.s32.totalorder %s18, 1
      %p99 = por %p97, %p98
      %p100 = scmp.ne.s32.totalorder %s91, %s92
      %p101 = scmp.eq.s32.totalorder %s18, 0
      %p102 = por %p100, %p101
      %p103 = scmp.ne.s32.totalorder %s91, %s92
      %p104 = scmp.eq.s32.totalorder %s19, 1
      %p105 = por %p103, %p104
      %p107 = scmp.ne.s32.totalorder %s92, %s106
      %p108 = scmp.eq.s32.totalorder %s19, 0
      %p109 = por %p107, %p108
      %s110 = ssub.s32 %s13, %s20
      %p111 = scmp.eq.s32.totalorder %s110, 0
      %s113 = sadd.s32 %s112, 1
      %s114 = scalar_select %p111, %s112, %s113
      %p117 = pneg %p111
      %p118 = scmp.eq.s32.totalorder %s13, 1
      %p119 = por %p117, %p118
      %p120 = scmp.ne.s32.totalorder %s112, %s115
      %p121 = scmp.eq.s32.totalorder %s13, 0
      %p122 = por %p120, %p121
      %p123 = scmp.ne.s32.totalorder %s112, %s115
      %p124 = scmp.eq.s32.totalorder %s18, 1
      %p125 = por %p123, %p124
      %p126 = scmp.ne.s32.totalorder %s115, %s116
      %p127 = scmp.eq.s32.totalorder %s18, 0
      %p128 = por %p126, %p127
      %p129 = scmp.ne.s32.totalorder %s115, %s116
      %p130 = scmp.eq.s32.totalorder %s19, 1
      %p131 = por %p129, %p130
      %p133 = scmp.ne.s32.totalorder %s116, %s132
      %p134 = scmp.eq.s32.totalorder %s19, 0
      %p135 = por %p133, %p134
      %p136 = scmp.le.s32.totalorder 1, %s13
      %p137 = scmp.lt.s32.totalorder %s13, 3
      %p138 = pnand %p136, %p137
      %p139 = pneg %p138
      // Predicated region
      $region9: #{tpu_custom_call.1} parent=5 // pred_check
        _
      $region10: #{tpu_custom_call.1} parent=5 // pred_check_branch
        %141 = sbr.rel (%p138) target = $region12
      $region11: #{tpu_custom_call.1} parent=5 // pred_region
        %s142 = ssub.s32 %s13, 1
        // Predicated region
        $region13: #{tpu_custom_call.1} parent=11 // pred_check
          %p143 = pneg %p60
        $region14: #{tpu_custom_call.1} parent=11 // pred_check_branch
          %145 = sbr.rel (%p143) target = $region16
        $region15: #{tpu_custom_call.1} parent=11 // pred_region
          _
        $region16: #{tpu_custom_call.1} parent=11 // pred_fallthru
          _
        // Predicated region
        $region17: #{tpu_custom_call.1} parent=11 // pred_check
          %p146 = pneg %p81
        $region18: #{tpu_custom_call.1} parent=11 // pred_check_branch
          %148 = sbr.rel (%p146) target = $region20
        $region19: #{tpu_custom_call.1} parent=11 // pred_region
          _
        $region20: #{tpu_custom_call.1} parent=11 // pred_fallthru
          _
        // Predicated region
        $region21: #{tpu_custom_call.1} parent=11 // pred_check
          %p149 = pneg %p102
        $region22: #{tpu_custom_call.1} parent=11 // pred_check_branch
          %151 = sbr.rel (%p149) target = $region24
        $region23: #{tpu_custom_call.1} parent=11 // pred_region
          _
        $region24: #{tpu_custom_call.1} parent=11 // pred_fallthru
          _
      $region12: #{tpu_custom_call.1} parent=5 // pred_fallthru
        _
      %p152 = scmp.lt.s32.totalorder %s13, 2
      // Predicated region
      $region25: #{tpu_custom_call.1} parent=5 // pred_check
        %p153 = pneg %p152
      $region26: #{tpu_custom_call.1} parent=5 // pred_check_branch
        %155 = sbr.rel (%p153) target = $region28
      $region27: #{tpu_custom_call.1} parent=5 // pred_region
        // Predicated region
        $region29: #{tpu_custom_call.1} parent=27 // pred_check
          %p156 = pneg %p33
        $region30: #{tpu_custom_call.1} parent=27 // pred_check_branch
          %158 = sbr.rel (%p156) target = $region32
        $region31: #{tpu_custom_call.1} parent=27 // pred_region
          %s159 = smul.u32 16, %s13
          %p160 = scmp.lt.s32.totalorder %s159, 31
          %s161 = scalar_select %p160, %s159, 31
          %s162 = smul.addr %s161, 8
          %s163 = scalar_lea.vmem %s0, %s162
          %s164 = smul.u32 16, %s13
        $region32: #{tpu_custom_call.1} parent=27 // pred_fallthru
          _
      $region28: #{tpu_custom_call.1} parent=5 // pred_fallthru
        _
      %p165 = scmp.le.s32.totalorder 1, %s13
      %p166 = scmp.lt.s32.totalorder %s13, 3
      %p167 = pnand %p165, %p166
      %p168 = pneg %p167
      // Predicated region
      $region33: #{tpu_custom_call.1} parent=5 // pred_check
        _
      $region34: #{tpu_custom_call.1} parent=5 // pred_check_branch
        %170 = sbr.rel (%p167) target = $region36
      $region35: #{tpu_custom_call.1} parent=5 // pred_region
        %s171 = ssub.s32 %s13, 1
        %s172 = smul.u32 16, %s18
        %p173 = scmp.lt.s32.totalorder %s172, 31
        %s174 = scalar_select %p173, %s172, 31
        %s175 = smul.addr %s174, 8
        %s176 = scalar_lea.vmem %s0, %s175
        %p177 = pneg %p39
        %p178 = pneg %p36
        %p179 = pneg %p60
        %p180 = pneg %p57
        %p181 = pneg %p81
        %p182 = pneg %p78
        %p183 = pneg %p102
        %p184 = pneg %p99
        %p185 = pneg %p128
        %p186 = pneg %p125
        %s187 = sand.u32 %s115, 1
        %s188 = scalar_lea.sflag [#allocation3], %s187
        %s189 = sand.u32 %s115, 1
        %s190 = smul.addr %s189, 256
        %s191 = scalar_lea.vmem [#allocation2], %s190
        %s192 = smul.u32 16, %s18
        %p193 = scmp.lt.s32.totalorder %s192, 31
        %s194 = scalar_select %p193, %s192, 31
        %s195 = smul.addr %s194, 8
        %s196 = scalar_lea.vmem %s0, %s195
        %s197 = smul.u32 16, %s18
        %s198 = smul.u32 16, %s18
        %v199 = vld [vmem:[%s196] sm:$0xff]
        %v200 = vld [vmem:[%s196 + $0x8] sm:$0xff]
        %v201 = vld [vmem:[%s196 + $0x10] sm:$0xff]
        %v202 = vld [vmem:[%s196 + $0x18] sm:$0xff]
        %v203 = vld [vmem:[%s196 + $0x20] sm:$0xff]
        %v204 = vld [vmem:[%s196 + $0x28] sm:$0xff]
        %v205 = vld [vmem:[%s196 + $0x30] sm:$0xff]
        %v206 = vld [vmem:[%s196 + $0x38] sm:$0xff]
        %v207 = vld [vmem:[%s196 + $0x40] sm:$0xff]
        %v208 = vld [vmem:[%s196 + $0x48] sm:$0xff]
        %v209 = vld [vmem:[%s196 + $0x50] sm:$0xff]
        %v210 = vld [vmem:[%s196 + $0x58] sm:$0xff]
        %v211 = vld [vmem:[%s196 + $0x60] sm:$0xff]
        %v212 = vld [vmem:[%s196 + $0x68] sm:$0xff]
        %v213 = vld [vmem:[%s196 + $0x70] sm:$0xff]
        %v214 = vld [vmem:[%s196 + $0x78] sm:$0xff]
        %v215 = vlaneseq
        %v216 = vand.u32 %v215, 127
        %217 = vset.pattern.permute.xlu0 0
        %218 = vperm.xlu0 %217, %v199
        %v219 = vpop.permute.xlu0 %218
        %220 = vset.pattern.permute.xlu0 0
        %221 = vperm.xlu0 %220, %v200
        %v222 = vpop.permute.xlu0 %221
        %223 = vset.pattern.permute.xlu0 0
        %224 = vperm.xlu0 %223, %v201
        %v225 = vpop.permute.xlu0 %224
        %226 = vset.pattern.permute.xlu0 0
        %227 = vperm.xlu0 %226, %v202
        %v228 = vpop.permute.xlu0 %227
        %229 = vset.pattern.permute.xlu0 0
        %230 = vperm.xlu0 %229, %v203
        %v231 = vpop.permute.xlu0 %230
        %232 = vset.pattern.permute.xlu0 0
        %233 = vperm.xlu0 %232, %v204
        %v234 = vpop.permute.xlu0 %233
        %235 = vset.pattern.permute.xlu0 0
        %236 = vperm.xlu0 %235, %v205
        %v237 = vpop.permute.xlu0 %236
        %238 = vset.pattern.permute.xlu0 0
        %239 = vperm.xlu0 %238, %v206
        %v240 = vpop.permute.xlu0 %239
        %241 = vset.pattern.permute.xlu0 0
        %242 = vperm.xlu0 %241, %v207
        %v243 = vpop.permute.xlu0 %242
        %244 = vset.pattern.permute.xlu0 0
        %245 = vperm.xlu0 %244, %v208
        %v246 = vpop.permute.xlu0 %245
        %247 = vset.pattern.permute.xlu0 0
        %248 = vperm.xlu0 %247, %v209
        %v249 = vpop.permute.xlu0 %248
        %250 = vset.pattern.permute.xlu0 0
        %251 = vperm.xlu0 %250, %v210
        %v252 = vpop.permute.xlu0 %251
        %253 = vset.pattern.permute.xlu0 0
        %254 = vperm.xlu0 %253, %v211
        %v255 = vpop.permute.xlu0 %254
        %256 = vset.pattern.permute.xlu0 0
        %257 = vperm.xlu0 %256, %v212
        %v258 = vpop.permute.xlu0 %257
        %259 = vset.pattern.permute.xlu0 0
        %260 = vperm.xlu0 %259, %v213
        %v261 = vpop.permute.xlu0 %260
        %262 = vset.pattern.permute.xlu0 0
        %263 = vperm.xlu0 %262, %v214
        %v264 = vpop.permute.xlu0 %263
        %vm265 = vcmp.eq.s32.totalorder %v219, %v216
        %vm266 = vcmp.eq.s32.totalorder %v222, %v216
        %vm267 = vcmp.eq.s32.totalorder %v225, %v216
        %vm268 = vcmp.eq.s32.totalorder %v228, %v216
        %vm269 = vcmp.eq.s32.totalorder %v231, %v216
        %vm270 = vcmp.eq.s32.totalorder %v234, %v216
        %vm271 = vcmp.eq.s32.totalorder %v237, %v216
        %vm272 = vcmp.eq.s32.totalorder %v240, %v216
        %vm273 = vcmp.eq.s32.totalorder %v243, %v216
        %vm274 = vcmp.eq.s32.totalorder %v246, %v216
        %vm275 = vcmp.eq.s32.totalorder %v249, %v216
        %vm276 = vcmp.eq.s32.totalorder %v252, %v216
        %vm277 = vcmp.eq.s32.totalorder %v255, %v216
        %vm278 = vcmp.eq.s32.totalorder %v258, %v216
        %vm279 = vcmp.eq.s32.totalorder %v261, %v216
        %vm280 = vcmp.eq.s32.totalorder %v264, %v216
        %v281 = vsel %vm265, 1, 0
        %v282 = vsel %vm266, 1, 0
        %v283 = vsel %vm267, 1, 0
        %v284 = vsel %vm268, 1, 0
        %v285 = vsel %vm269, 1, 0
        %v286 = vsel %vm270, 1, 0
        %v287 = vsel %vm271, 1, 0
        %v288 = vsel %vm272, 1, 0
        %v289 = vsel %vm273, 1, 0
        %v290 = vsel %vm274, 1, 0
        %v291 = vsel %vm275, 1, 0
        %v292 = vsel %vm276, 1, 0
        %v293 = vsel %vm277, 1, 0
        %v294 = vsel %vm278, 1, 0
        %v295 = vsel %vm279, 1, 0
        %v296 = vsel %vm280, 1, 0
        %v297 = vcvt.s32.f32 %v281
        %v298 = vcvt.s32.f32 %v282
        %v299 = vcvt.s32.f32 %v283
        %v300 = vcvt.s32.f32 %v284
        %v301 = vcvt.s32.f32 %v285
        %v302 = vcvt.s32.f32 %v286
        %v303 = vcvt.s32.f32 %v287
        %v304 = vcvt.s32.f32 %v288
        %v305 = vcvt.s32.f32 %v289
        %v306 = vcvt.s32.f32 %v290
        %v307 = vcvt.s32.f32 %v291
        %v308 = vcvt.s32.f32 %v292
        %v309 = vcvt.s32.f32 %v293
        %v310 = vcvt.s32.f32 %v294
        %v311 = vcvt.s32.f32 %v295
        %v312 = vcvt.s32.f32 %v296
        %v313 = vld [vmem:[%s1] sm:$0xff]
        %v314 = vld [vmem:[%s1 + $0x8] sm:$0xff]
        %v315 = vld [vmem:[%s1 + $0x10] sm:$0xff]
        %v316 = vld [vmem:[%s1 + $0x18] sm:$0xff]
        %v317 = vld [vmem:[%s1 + $0x20] sm:$0xff]
        %v318 = vld [vmem:[%s1 + $0x28] sm:$0xff]
        %v319 = vld [vmem:[%s1 + $0x30] sm:$0xff]
        %v320 = vld [vmem:[%s1 + $0x38] sm:$0xff]
        %vm321 = vcmask 523264
        %v323 = vsel %vm321, %v297, 0
        %v326 = vsel %vm321, %v298, 0
        %v329 = vsel %vm321, %v299, 0
        %v332 = vsel %vm321, %v300, 0
        %v335 = vsel %vm321, %v301, 0
        %v338 = vsel %vm321, %v302, 0
        %v341 = vsel %vm321, %v303, 0
        %v344 = vsel %vm321, %v304, 0
        %v347 = vsel %vm321, %v305, 0
        %v350 = vsel %vm321, %v306, 0
        %v353 = vsel %vm321, %v307, 0
        %v356 = vsel %vm321, %v308, 0
        %v359 = vsel %vm321, %v309, 0
        %v362 = vsel %vm321, %v310, 0
        %v365 = vsel %vm321, %v311, 0
        %v368 = vsel %vm321, %v312, 0
        %370 = vmatprep.subr.mxu0 0.0
        %371 = vmatpush1.msra.mxu0 %v313
        %372 = vmatprep.subr.mxu0 0.0
        %373 = vmatpush1.msra.mxu0 %v314
        %374 = vmatprep.subr.mxu0 0.0
        %375 = vmatpush1.msra.mxu0 %v315
        %376 = vmatprep.subr.mxu0 0.0
        %377 = vmatpush1.msra.mxu0 %v316
        %378 = vmatprep.subr.mxu0 0.0
        %379 = vmatpush1.msra.mxu0 %v317
        %380 = vmatprep.subr.mxu0 0.0
        %381 = vmatpush1.msra.mxu0 %v318
        %382 = vmatprep.subr.mxu0 0.0
        %383 = vmatpush1.msra.mxu0 %v319
        %384 = vmatprep.subr.mxu0 0.0
        %385 = vmatpush1.msra.mxu0 %v320
        %386 = vmatprep.subr.mxu0 0.0
        %387 = vmatpush1.msra.mxu0 0.0
        %388 = vmatprep.subr.mxu0 0.0
        %389 = vmatpush1.msra.mxu0 0.0
        %390 = vmatprep.subr.mxu0 0.0
        %391 = vmatpush1.msra.mxu0 0.0
        %392 = vmatprep.subr.mxu0 0.0
        %393 = vmatpush1.msra.mxu0 0.0
        %394 = vmatprep.subr.mxu0 0.0
        %395 = vmatpush1.msra.mxu0 0.0
        %396 = vmatprep.subr.mxu0 0.0
        %397 = vmatpush1.msra.mxu0 0.0
        %398 = vmatprep.subr.mxu0 0.0
        %399 = vmatpush1.msra.mxu0 0.0
        %400 = vmatprep.subr.mxu0 0.0
        %401 = vmatpush1.msra.mxu0 0.0
        %402 = vmatprep.subr.mxu0 0.0
        %403 = vmatpush1.msra.mxu0 0.0
        %404 = vmatprep.subr.mxu0 0.0
        %405 = vmatpush1.msra.mxu0 0.0
        %406 = vmatprep.subr.mxu0 0.0
        %407 = vmatpush1.msra.mxu0 0.0
        %408 = vmatprep.subr.mxu0 0.0
        %409 = vmatpush1.msra.mxu0 0.0
        %410 = vmatprep.subr.mxu0 0.0
        %411 = vmatpush1.msra.mxu0 0.0
        %412 = vmatprep.subr.mxu0 0.0
        %413 = vmatpush1.msra.mxu0 0.0
        %414 = vmatprep.subr.mxu0 0.0
        %415 = vmatpush1.msra.mxu0 0.0
        %416 = vmatprep.subr.mxu0 0.0
        %417 = vmatpush1.msra.mxu0 0.0
        %418 = vmatprep.subr.mxu0 0.0
        %419 = vmatpush1.msra.mxu0 0.0
        %420 = vmatprep.subr.mxu0 0.0
        %421 = vmatpush1.msra.mxu0 0.0
        %422 = vmatprep.subr.mxu0 0.0
        %423 = vmatpush1.msra.mxu0 0.0
        %424 = vmatprep.subr.mxu0 0.0
        %425 = vmatpush1.msra.mxu0 0.0
        %426 = vmatprep.subr.mxu0 0.0
        %427 = vmatpush1.msra.mxu0 0.0
        %428 = vmatprep.subr.mxu0 0.0
        %429 = vmatpush1.msra.mxu0 0.0
        %430 = vmatprep.subr.mxu0 0.0
        %431 = vmatpush1.msra.mxu0 0.0
        %432 = vmatprep.subr.mxu0 0.0
        %433 = vmatpush1.msra.mxu0 0.0
        %434 = vmatprep.mubr.f32.mxu0 0.0
        %435 = vmatmul.mubr.f32.gmra.mrb[0].mxu0 %v323
        %v436 = vpop.f32.mrb[0].mxu0
        %v437 = vadd.f32 0.0, %v436
        %v438 = vpop.f32.mrb[0].mxu0
        %439 = vmatprep.mubr.f32.mxu0 0.0
        %440 = vmatmul.mubr.f32.gmra.mrb[0].mxu0 %v326
        %v441 = vpop.f32.mrb[0].mxu0
        %v442 = vadd.f32 0.0, %v441
        %v443 = vpop.f32.mrb[0].mxu0
        %444 = vmatprep.mubr.f32.mxu0 0.0
        %445 = vmatmul.mubr.f32.gmra.mrb[0].mxu0 %v329
        %v446 = vpop.f32.mrb[0].mxu0
        %v447 = vadd.f32 0.0, %v446
        %v448 = vpop.f32.mrb[0].mxu0
        %449 = vmatprep.mubr.f32.mxu0 0.0
        %450 = vmatmul.mubr.f32.gmra.mrb[0].mxu0 %v332
        %v451 = vpop.f32.mrb[0].mxu0
        %v452 = vadd.f32 0.0, %v451
        %v453 = vpop.f32.mrb[0].mxu0
        %454 = vmatprep.mubr.f32.mxu0 0.0
        %455 = vmatmul.mubr.f32.gmra.mrb[0].mxu0 %v335
        %v456 = vpop.f32.mrb[0].mxu0
        %v457 = vadd.f32 0.0, %v456
        %v458 = vpop.f32.mrb[0].mxu0
        %459 = vmatprep.mubr.f32.mxu0 0.0
        %460 = vmatmul.mubr.f32.gmra.mrb[0].mxu0 %v338
        %v461 = vpop.f32.mrb[0].mxu0
        %v462 = vadd.f32 0.0, %v461
        %v463 = vpop.f32.mrb[0].mxu0
        %464 = vmatprep.mubr.f32.mxu0 0.0
        %465 = vmatmul.mubr.f32.gmra.mrb[0].mxu0 %v341
        %v466 = vpop.f32.mrb[0].mxu0
        %v467 = vadd.f32 0.0, %v466
        %v468 = vpop.f32.mrb[0].mxu0
        %469 = vmatprep.mubr.f32.mxu0 0.0
        %470 = vmatmul.mubr.f32.gmra.mrb[0].mxu0 %v344
        %v471 = vpop.f32.mrb[0].mxu0
        %v472 = vadd.f32 0.0, %v471
        %v473 = vpop.f32.mrb[0].mxu0
        %474 = vmatprep.mubr.f32.mxu0 0.0
        %475 = vmatmul.mubr.f32.gmra.mrb[0].mxu0 %v347
        %v476 = vpop.f32.mrb[0].mxu0
        %v477 = vadd.f32 0.0, %v476
        %v478 = vpop.f32.mrb[0].mxu0
        %479 = vmatprep.mubr.f32.mxu0 0.0
        %480 = vmatmul.mubr.f32.gmra.mrb[0].mxu0 %v350
        %v481 = vpop.f32.mrb[0].mxu0
        %v482 = vadd.f32 0.0, %v481
        %v483 = vpop.f32.mrb[0].mxu0
        %484 = vmatprep.mubr.f32.mxu0 0.0
        %485 = vmatmul.mubr.f32.gmra.mrb[0].mxu0 %v353
        %v486 = vpop.f32.mrb[0].mxu0
        %v487 = vadd.f32 0.0, %v486
        %v488 = vpop.f32.mrb[0].mxu0
        %489 = vmatprep.mubr.f32.mxu0 0.0
        %490 = vmatmul.mubr.f32.gmra.mrb[0].mxu0 %v356
        %v491 = vpop.f32.mrb[0].mxu0
        %v492 = vadd.f32 0.0, %v491
        %v493 = vpop.f32.mrb[0].mxu0
        %494 = vmatprep.mubr.f32.mxu0 0.0
        %495 = vmatmul.mubr.f32.gmra.mrb[0].mxu0 %v359
        %v496 = vpop.f32.mrb[0].mxu0
        %v497 = vadd.f32 0.0, %v496
        %v498 = vpop.f32.mrb[0].mxu0
        %499 = vmatprep.mubr.f32.mxu0 0.0
        %500 = vmatmul.mubr.f32.gmra.mrb[0].mxu0 %v362
        %v501 = vpop.f32.mrb[0].mxu0
        %v502 = vadd.f32 0.0, %v501
        %v503 = vpop.f32.mrb[0].mxu0
        %504 = vmatprep.mubr.f32.mxu0 0.0
        %505 = vmatmul.mubr.f32.gmra.mrb[0].mxu0 %v365
        %v506 = vpop.f32.mrb[0].mxu0
        %v507 = vadd.f32 0.0, %v506
        %v508 = vpop.f32.mrb[0].mxu0
        %509 = vmatprep.mubr.f32.mxu0 0.0
        %510 = vmatmul.mubr.f32.gmra.mrb[0].mxu0 %v368
        %v511 = vpop.f32.mrb[0].mxu0
        %v512 = vadd.f32 0.0, %v511
        %v513 = vpop.f32.mrb[0].mxu0
        %514 = vdwg.mxu0
        %v515 = vld [vmem:[%s2] sm:$0xff]
        %v516 = vld [vmem:[%s2 + $0x8] sm:$0xff]
        %v517 = vld [vmem:[%s2 + $0x10] sm:$0xff]
        %v518 = vld [vmem:[%s2 + $0x18] sm:$0xff]
        %v519 = vld [vmem:[%s2 + $0x20] sm:$0xff]
        %v520 = vld [vmem:[%s2 + $0x28] sm:$0xff]
        %v521 = vld [vmem:[%s2 + $0x30] sm:$0xff]
        %v522 = vld [vmem:[%s2 + $0x38] sm:$0xff]
        %v523 = vld [vmem:[%s3] sm:$0x3]
        %v525 = vlaneseq
        %v526 = vshrl.u32 %v525, 7
        %v527 = vsub.s32 0, %v526
        %v528 = vrot.slane %v523, %v527
        %v529 = vlaneseq
        %v530 = vshrl.u32 %v529, 7
        %v531 = vsub.s32 1, %v530
        %v532 = vrot.slane %v523, %v531
        %vm535 = vcmask 261120
        %v537 = vsel %vm535, %v437, 0
        %v540 = vsel %vm535, %v442, 0
        %v543 = vsel %vm535, %v447, 0
        %v546 = vsel %vm535, %v452, 0
        %v549 = vsel %vm535, %v457, 0
        %v552 = vsel %vm535, %v462, 0
        %v555 = vsel %vm535, %v467, 0
        %v558 = vsel %vm535, %v472, 0
        %v561 = vsel %vm535, %v477, 0
        %v564 = vsel %vm535, %v482, 0
        %v567 = vsel %vm535, %v487, 0
        %v570 = vsel %vm535, %v492, 0
        %v573 = vsel %vm535, %v497, 0
        %v576 = vsel %vm535, %v502, 0
        %v579 = vsel %vm535, %v507, 0
        %v582 = vsel %vm535, %v512, 0
        %584 = vmatprep.subr.mxu0 %v516
        %585 = vmatpush1.msra.mxu0 %v515
        %586 = vmatprep.subr.mxu0 %v518
        %587 = vmatpush1.msra.mxu0 %v517
        %588 = vmatprep.subr.mxu0 %v520
        %589 = vmatpush1.msra.mxu0 %v519
        %590 = vmatprep.subr.mxu0 %v522
        %591 = vmatpush1.msra.mxu0 %v521
        %592 = vmatprep.subr.mxu0 0.0
        %593 = vmatpush1.msra.mxu0 0.0
        %594 = vmatprep.subr.mxu0 0.0
        %595 = vmatpush1.msra.mxu0 0.0
        %596 = vmatprep.subr.mxu0 0.0
        %597 = vmatpush1.msra.mxu0 0.0
        %598 = vmatprep.subr.mxu0 0.0
        %599 = vmatpush1.msra.mxu0 0.0
        %600 = vmatprep.subr.mxu0 0.0
        %601 = vmatpush1.msra.mxu0 0.0
        %602 = vmatprep.subr.mxu0 0.0
        %603 = vmatpush1.msra.mxu0 0.0
        %604 = vmatprep.subr.mxu0 0.0
        %605 = vmatpush1.msra.mxu0 0.0
        %606 = vmatprep.subr.mxu0 0.0
        %607 = vmatpush1.msra.mxu0 0.0
        %608 = vmatprep.subr.mxu0 0.0
        %609 = vmatpush1.msra.mxu0 0.0
        %610 = vmatprep.subr.mxu0 0.0
        %611 = vmatpush1.msra.mxu0 0.0
        %612 = vmatprep.subr.mxu0 0.0
        %613 = vmatpush1.msra.mxu0 0.0
        %614 = vmatprep.subr.mxu0 0.0
        %615 = vmatpush1.msra.mxu0 0.0
        %616 = vmatprep.subr.mxu0 0.0
        %617 = vmatpush1.msra.mxu0 0.0
        %618 = vmatprep.subr.mxu0 0.0
        %619 = vmatpush1.msra.mxu0 0.0
        %620 = vmatprep.subr.mxu0 0.0
        %621 = vmatpush1.msra.mxu0 0.0
        %622 = vmatprep.subr.mxu0 0.0
        %623 = vmatpush1.msra.mxu0 0.0
        %624 = vmatprep.subr.mxu0 0.0
        %625 = vmatpush1.msra.mxu0 0.0
        %626 = vmatprep.subr.mxu0 0.0
        %627 = vmatpush1.msra.mxu0 0.0
        %628 = vmatprep.subr.mxu0 0.0
        %629 = vmatpush1.msra.mxu0 0.0
        %630 = vmatprep.subr.mxu0 0.0
        %631 = vmatpush1.msra.mxu0 0.0
        %632 = vmatprep.subr.mxu0 0.0
        %633 = vmatpush1.msra.mxu0 0.0
        %634 = vmatprep.subr.mxu0 0.0
        %635 = vmatpush1.msra.mxu0 0.0
        %636 = vmatprep.subr.mxu0 0.0
        %637 = vmatpush1.msra.mxu0 0.0
        %638 = vmatprep.subr.mxu0 0.0
        %639 = vmatpush1.msra.mxu0 0.0
        %640 = vmatprep.subr.mxu0 0.0
        %641 = vmatpush1.msra.mxu0 0.0
        %642 = vmatprep.subr.mxu0 0.0
        %643 = vmatpush1.msra.mxu0 0.0
        %644 = vmatprep.subr.mxu0 0.0
        %645 = vmatpush1.msra.mxu0 0.0
        %646 = vmatprep.subr.mxu0 0.0
        %647 = vmatpush1.msra.mxu0 0.0
        %648 = vmatprep.mubr.f32.mxu0 0.0
        %649 = vmatmul.mubr.f32.gmra.mrb[0].mxu0 %v537
        %v650 = vpop.f32.mrb[0].mxu0
        %v651 = vadd.f32 %v528, %v650
        %v652 = vpop.f32.mrb[0].mxu0
        %v653 = vadd.f32 %v532, %v652
        %654 = vmatprep.mubr.f32.mxu0 0.0
        %655 = vmatmul.mubr.f32.gmra.mrb[0].mxu0 %v540
        %v656 = vpop.f32.mrb[0].mxu0
        %v657 = vadd.f32 %v528, %v656
        %v658 = vpop.f32.mrb[0].mxu0
        %v659 = vadd.f32 %v532, %v658
        %660 = vmatprep.mubr.f32.mxu0 0.0
        %661 = vmatmul.mubr.f32.gmra.mrb[0].mxu0 %v543
        %v662 = vpop.f32.mrb[0].mxu0
        %v663 = vadd.f32 %v528, %v662
        %v664 = vpop.f32.mrb[0].mxu0
        %v665 = vadd.f32 %v532, %v664
        %666 = vmatprep.mubr.f32.mxu0 0.0
        %667 = vmatmul.mubr.f32.gmra.mrb[0].mxu0 %v546
        %v668 = vpop.f32.mrb[0].mxu0
        %v669 = vadd.f32 %v528, %v668
        %v670 = vpop.f32.mrb[0].mxu0
        %v671 = vadd.f32 %v532, %v670
        %672 = vmatprep.mubr.f32.mxu0 0.0
        %673 = vmatmul.mubr.f32.gmra.mrb[0].mxu0 %v549
        %v674 = vpop.f32.mrb[0].mxu0
        %v675 = vadd.f32 %v528, %v674
        %v676 = vpop.f32.mrb[0].mxu0
        %v677 = vadd.f32 %v532, %v676
        %678 = vmatprep.mubr.f32.mxu0 0.0
        %679 = vmatmul.mubr.f32.gmra.mrb[0].mxu0 %v552
        %v680 = vpop.f32.mrb[0].mxu0
        %v681 = vadd.f32 %v528, %v680
        %v682 = vpop.f32.mrb[0].mxu0
        %v683 = vadd.f32 %v532, %v682
        %684 = vmatprep.mubr.f32.mxu0 0.0
        %685 = vmatmul.mubr.f32.gmra.mrb[0].mxu0 %v555
        %v686 = vpop.f32.mrb[0].mxu0
        %v687 = vadd.f32 %v528, %v686
        %v688 = vpop.f32.mrb[0].mxu0
        %v689 = vadd.f32 %v532, %v688
        %690 = vmatprep.mubr.f32.mxu0 0.0
        %691 = vmatmul.mubr.f32.gmra.mrb[0].mxu0 %v558
        %v692 = vpop.f32.mrb[0].mxu0
        %v693 = vadd.f32 %v528, %v692
        %v694 = vpop.f32.mrb[0].mxu0
        %v695 = vadd.f32 %v532, %v694
        %696 = vmatprep.mubr.f32.mxu0 0.0
        %697 = vmatmul.mubr.f32.gmra.mrb[0].mxu0 %v561
        %v698 = vpop.f32.mrb[0].mxu0
        %v699 = vadd.f32 %v528, %v698
        %v700 = vpop.f32.mrb[0].mxu0
        %v701 = vadd.f32 %v532, %v700
        %702 = vmatprep.mubr.f32.mxu0 0.0
        %703 = vmatmul.mubr.f32.gmra.mrb[0].mxu0 %v564
        %v704 = vpop.f32.mrb[0].mxu0
        %v705 = vadd.f32 %v528, %v704
        %v706 = vpop.f32.mrb[0].mxu0
        %v707 = vadd.f32 %v532, %v706
        %708 = vmatprep.mubr.f32.mxu0 0.0
        %709 = vmatmul.mubr.f32.gmra.mrb[0].mxu0 %v567
        %v710 = vpop.f32.mrb[0].mxu0
        %v711 = vadd.f32 %v528, %v710
        %v712 = vpop.f32.mrb[0].mxu0
        %v713 = vadd.f32 %v532, %v712
        %714 = vmatprep.mubr.f32.mxu0 0.0
        %715 = vmatmul.mubr.f32.gmra.mrb[0].mxu0 %v570
        %v716 = vpop.f32.mrb[0].mxu0
        %v717 = vadd.f32 %v528, %v716
        %v718 = vpop.f32.mrb[0].mxu0
        %v719 = vadd.f32 %v532, %v718
        %720 = vmatprep.mubr.f32.mxu0 0.0
        %721 = vmatmul.mubr.f32.gmra.mrb[0].mxu0 %v573
        %v722 = vpop.f32.mrb[0].mxu0
        %v723 = vadd.f32 %v528, %v722
        %v724 = vpop.f32.mrb[0].mxu0
        %v725 = vadd.f32 %v532, %v724
        %726 = vmatprep.mubr.f32.mxu0 0.0
        %727 = vmatmul.mubr.f32.gmra.mrb[0].mxu0 %v576
        %v728 = vpop.f32.mrb[0].mxu0
        %v729 = vadd.f32 %v528, %v728
        %v730 = vpop.f32.mrb[0].mxu0
        %v731 = vadd.f32 %v532, %v730
        %732 = vmatprep.mubr.f32.mxu0 0.0
        %733 = vmatmul.mubr.f32.gmra.mrb[0].mxu0 %v579
        %v734 = vpop.f32.mrb[0].mxu0
        %v735 = vadd.f32 %v528, %v734
        %v736 = vpop.f32.mrb[0].mxu0
        %v737 = vadd.f32 %v532, %v736
        %738 = vmatprep.mubr.f32.mxu0 0.0
        %739 = vmatmul.mubr.f32.gmra.mrb[0].mxu0 %v582
        %v740 = vpop.f32.mrb[0].mxu0
        %v741 = vadd.f32 %v528, %v740
        %v742 = vpop.f32.mrb[0].mxu0
        %v743 = vadd.f32 %v532, %v742
        %744 = vdwg.mxu0
        %v745 = vmax.f32 %v651, %v653
        %746 = vmax.xlane.f32.xlu0 %v745
        %v747 = vpop.xlane.xlu0 %746
        %v748 = vmax.f32 %v657, %v659
        %749 = vmax.xlane.f32.xlu0 %v748
        %v750 = vpop.xlane.xlu0 %749
        %v751 = vmax.f32 %v663, %v665
        %752 = vmax.xlane.f32.xlu0 %v751
        %v753 = vpop.xlane.xlu0 %752
        %v754 = vmax.f32 %v669, %v671
        %755 = vmax.xlane.f32.xlu0 %v754
        %v756 = vpop.xlane.xlu0 %755
        %v757 = vmax.f32 %v675, %v677
        %758 = vmax.xlane.f32.xlu0 %v757
        %v759 = vpop.xlane.xlu0 %758
        %v760 = vmax.f32 %v681, %v683
        %761 = vmax.xlane.f32.xlu0 %v760
        %v762 = vpop.xlane.xlu0 %761
        %v763 = vmax.f32 %v687, %v689
        %764 = vmax.xlane.f32.xlu0 %v763
        %v765 = vpop.xlane.xlu0 %764
        %v766 = vmax.f32 %v693, %v695
        %767 = vmax.xlane.f32.xlu0 %v766
        %v768 = vpop.xlane.xlu0 %767
        %v769 = vmax.f32 %v699, %v701
        %770 = vmax.xlane.f32.xlu0 %v769
        %v771 = vpop.xlane.xlu0 %770
        %v772 = vmax.f32 %v705, %v707
        %773 = vmax.xlane.f32.xlu0 %v772
        %v774 = vpop.xlane.xlu0 %773
        %v775 = vmax.f32 %v711, %v713
        %776 = vmax.xlane.f32.xlu0 %v775
        %v777 = vpop.xlane.xlu0 %776
        %v778 = vmax.f32 %v717, %v719
        %779 = vmax.xlane.f32.xlu0 %v778
        %v780 = vpop.xlane.xlu0 %779
        %v781 = vmax.f32 %v723, %v725
        %782 = vmax.xlane.f32.xlu0 %v781
        %v783 = vpop.xlane.xlu0 %782
        %v784 = vmax.f32 %v729, %v731
        %785 = vmax.xlane.f32.xlu0 %v784
        %v786 = vpop.xlane.xlu0 %785
        %v787 = vmax.f32 %v735, %v737
        %788 = vmax.xlane.f32.xlu0 %v787
        %v789 = vpop.xlane.xlu0 %788
        %v790 = vmax.f32 %v741, %v743
        %791 = vmax.xlane.f32.xlu0 %v790
        %v792 = vpop.xlane.xlu0 %791
        %v793 = vsub.f32 %v651, %v747
        %v794 = vsub.f32 %v653, %v747
        %v795 = vsub.f32 %v657, %v750
        %v796 = vsub.f32 %v659, %v750
        %v797 = vsub.f32 %v663, %v753
        %v798 = vsub.f32 %v665, %v753
        %v799 = vsub.f32 %v669, %v756
        %v800 = vsub.f32 %v671, %v756
        %v801 = vsub.f32 %v675, %v759
        %v802 = vsub.f32 %v677, %v759
        %v803 = vsub.f32 %v681, %v762
        %v804 = vsub.f32 %v683, %v762
        %v805 = vsub.f32 %v687, %v765
        %v806 = vsub.f32 %v689, %v765
        %v807 = vsub.f32 %v693, %v768
        %v808 = vsub.f32 %v695, %v768
        %v809 = vsub.f32 %v699, %v771
        %v810 = vsub.f32 %v701, %v771
        %v811 = vsub.f32 %v705, %v774
        %v812 = vsub.f32 %v707, %v774
        %v813 = vsub.f32 %v711, %v777
        %v814 = vsub.f32 %v713, %v777
        %v815 = vsub.f32 %v717, %v780
        %v816 = vsub.f32 %v719, %v780
        %v817 = vsub.f32 %v723, %v783
        %v818 = vsub.f32 %v725, %v783
        %v819 = vsub.f32 %v729, %v786
        %v820 = vsub.f32 %v731, %v786
        %v821 = vsub.f32 %v735, %v789
        %v822 = vsub.f32 %v737, %v789
        %v823 = vsub.f32 %v741, %v792
        %v824 = vsub.f32 %v743, %v792
        %v825 = vmul.f32 %v793, 1.442695
        %v826 = vpow.pop %v825
        %v827 = vmul.f32 %v794, 1.442695
        %v828 = vpow.pop %v827
        %v829 = vmul.f32 %v795, 1.442695
        %v830 = vpow.pop %v829
        %v831 = vmul.f32 %v796, 1.442695
        %v832 = vpow.pop %v831
        %v833 = vmul.f32 %v797, 1.442695
        %v834 = vpow.pop %v833
        %v835 = vmul.f32 %v798, 1.442695
        %v836 = vpow.pop %v835
        %v837 = vmul.f32 %v799, 1.442695
        %v838 = vpow.pop %v837
        %v839 = vmul.f32 %v800, 1.442695
        %v840 = vpow.pop %v839
        %v841 = vmul.f32 %v801, 1.442695
        %v842 = vpow.pop %v841
        %v843 = vmul.f32 %v802, 1.442695
        %v844 = vpow.pop %v843
        %v845 = vmul.f32 %v803, 1.442695
        %v846 = vpow.pop %v845
        %v847 = vmul.f32 %v804, 1.442695
        %v848 = vpow.pop %v847
        %v849 = vmul.f32 %v805, 1.442695
        %v850 = vpow.pop %v849
        %v851 = vmul.f32 %v806, 1.442695
        %v852 = vpow.pop %v851
        %v853 = vmul.f32 %v807, 1.442695
        %v854 = vpow.pop %v853
        %v855 = vmul.f32 %v808, 1.442695
        %v856 = vpow.pop %v855
        %v857 = vmul.f32 %v809, 1.442695
        %v858 = vpow.pop %v857
        %v859 = vmul.f32 %v810, 1.442695
        %v860 = vpow.pop %v859
        %v861 = vmul.f32 %v811, 1.442695
        %v862 = vpow.pop %v861
        %v863 = vmul.f32 %v812, 1.442695
        %v864 = vpow.pop %v863
        %v865 = vmul.f32 %v813, 1.442695
        %v866 = vpow.pop %v865
        %v867 = vmul.f32 %v814, 1.442695
        %v868 = vpow.pop %v867
        %v869 = vmul.f32 %v815, 1.442695
        %v870 = vpow.pop %v869
        %v871 = vmul.f32 %v816, 1.442695
        %v872 = vpow.pop %v871
        %v873 = vmul.f32 %v817, 1.442695
        %v874 = vpow.pop %v873
        %v875 = vmul.f32 %v818, 1.442695
        %v876 = vpow.pop %v875
        %v877 = vmul.f32 %v819, 1.442695
        %v878 = vpow.pop %v877
        %v879 = vmul.f32 %v820, 1.442695
        %v880 = vpow.pop %v879
        %v881 = vmul.f32 %v821, 1.442695
        %v882 = vpow.pop %v881
        %v883 = vmul.f32 %v822, 1.442695
        %v884 = vpow.pop %v883
        %v885 = vmul.f32 %v823, 1.442695
        %v886 = vpow.pop %v885
        %v887 = vmul.f32 %v824, 1.442695
        %v888 = vpow.pop %v887
        %v889 = vadd.f32 %v826, %v828
        %890 = vadd.xlane.f32.xlu0 %v889
        %v891 = vpop.xlane.xlu0 %890
        %v892 = vadd.f32 %v830, %v832
        %893 = vadd.xlane.f32.xlu0 %v892
        %v894 = vpop.xlane.xlu0 %893
        %v895 = vadd.f32 %v834, %v836
        %896 = vadd.xlane.f32.xlu0 %v895
        %v897 = vpop.xlane.xlu0 %896
        %v898 = vadd.f32 %v838, %v840
        %899 = vadd.xlane.f32.xlu0 %v898
        %v900 = vpop.xlane.xlu0 %899
        %v901 = vadd.f32 %v842, %v844
        %902 = vadd.xlane.f32.xlu0 %v901
        %v903 = vpop.xlane.xlu0 %902
        %v904 = vadd.f32 %v846, %v848
        %905 = vadd.xlane.f32.xlu0 %v904
        %v906 = vpop.xlane.xlu0 %905
        %v907 = vadd.f32 %v850, %v852
        %908 = vadd.xlane.f32.xlu0 %v907
        %v909 = vpop.xlane.xlu0 %908
        %v910 = vadd.f32 %v854, %v856
        %911 = vadd.xlane.f32.xlu0 %v910
        %v912 = vpop.xlane.xlu0 %911
        %v913 = vadd.f32 %v858, %v860
        %914 = vadd.xlane.f32.xlu0 %v913
        %v915 = vpop.xlane.xlu0 %914
        %v916 = vadd.f32 %v862, %v864
        %917 = vadd.xlane.f32.xlu0 %v916
        %v918 = vpop.xlane.xlu0 %917
        %v919 = vadd.f32 %v866, %v868
        %920 = vadd.xlane.f32.xlu0 %v919
        %v921 = vpop.xlane.xlu0 %920
        %v922 = vadd.f32 %v870, %v872
        %923 = vadd.xlane.f32.xlu0 %v922
        %v924 = vpop.xlane.xlu0 %923
        %v925 = vadd.f32 %v874, %v876
        %926 = vadd.xlane.f32.xlu0 %v925
        %v927 = vpop.xlane.xlu0 %926
        %v928 = vadd.f32 %v878, %v880
        %929 = vadd.xlane.f32.xlu0 %v928
        %v930 = vpop.xlane.xlu0 %929
        %v931 = vadd.f32 %v882, %v884
        %932 = vadd.xlane.f32.xlu0 %v931
        %v933 = vpop.xlane.xlu0 %932
        %v934 = vadd.f32 %v886, %v888
        %935 = vadd.xlane.f32.xlu0 %v934
        %v936 = vpop.xlane.xlu0 %935
        %v937 = vlog2.pop %v891
        %v938 = vmul.f32 %v937, 0.6931472
        %v939 = vlog2.pop %v894
        %v940 = vmul.f32 %v939, 0.6931472
        %v941 = vlog2.pop %v897
        %v942 = vmul.f32 %v941, 0.6931472
        %v943 = vlog2.pop %v900
        %v944 = vmul.f32 %v943, 0.6931472
        %v945 = vlog2.pop %v903
        %v946 = vmul.f32 %v945, 0.6931472
        %v947 = vlog2.pop %v906
        %v948 = vmul.f32 %v947, 0.6931472
        %v949 = vlog2.pop %v909
        %v950 = vmul.f32 %v949, 0.6931472
        %v951 = vlog2.pop %v912
        %v952 = vmul.f32 %v951, 0.6931472
        %v953 = vlog2.pop %v915
        %v954 = vmul.f32 %v953, 0.6931472
        %v955 = vlog2.pop %v918
        %v956 = vmul.f32 %v955, 0.6931472
        %v957 = vlog2.pop %v921
        %v958 = vmul.f32 %v957, 0.6931472
        %v959 = vlog2.pop %v924
        %v960 = vmul.f32 %v959, 0.6931472
        %v961 = vlog2.pop %v927
        %v962 = vmul.f32 %v961, 0.6931472
        %v963 = vlog2.pop %v930
        %v964 = vmul.f32 %v963, 0.6931472
        %v965 = vlog2.pop %v933
        %v966 = vmul.f32 %v965, 0.6931472
        %v967 = vlog2.pop %v936
        %v968 = vmul.f32 %v967, 0.6931472
        %v969 = vsub.f32 %v793, %v938
        %v970 = vsub.f32 %v794, %v938
        %v971 = vsub.f32 %v795, %v940
        %v972 = vsub.f32 %v796, %v940
        %v973 = vsub.f32 %v797, %v942
        %v974 = vsub.f32 %v798, %v942
        %v975 = vsub.f32 %v799, %v944
        %v976 = vsub.f32 %v800, %v944
        %v977 = vsub.f32 %v801, %v946
        %v978 = vsub.f32 %v802, %v946
        %v979 = vsub.f32 %v803, %v948
        %v980 = vsub.f32 %v804, %v948
        %v981 = vsub.f32 %v805, %v950
        %v982 = vsub.f32 %v806, %v950
        %v983 = vsub.f32 %v807, %v952
        %v984 = vsub.f32 %v808, %v952
        %v985 = vsub.f32 %v809, %v954
        %v986 = vsub.f32 %v810, %v954
        %v987 = vsub.f32 %v811, %v956
        %v988 = vsub.f32 %v812, %v956
        %v989 = vsub.f32 %v813, %v958
        %v990 = vsub.f32 %v814, %v958
        %v991 = vsub.f32 %v815, %v960
        %v992 = vsub.f32 %v816, %v960
        %v993 = vsub.f32 %v817, %v962
        %v994 = vsub.f32 %v818, %v962
        %v995 = vsub.f32 %v819, %v964
        %v996 = vsub.f32 %v820, %v964
        %v997 = vsub.f32 %v821, %v966
        %v998 = vsub.f32 %v822, %v966
        %v999 = vsub.f32 %v823, %v968
        %v1000 = vsub.f32 %v824, %v968
        %1001 = vst [vmem:[%s191] sm:$0xff] %v969
        %1002 = vst [vmem:[%s191 + $0x8] sm:$0xff] %v970
        %1003 = vst [vmem:[%s191 + $0x10] sm:$0xff] %v971
        %1004 = vst [vmem:[%s191 + $0x18] sm:$0xff] %v972
        %1005 = vst [vmem:[%s191 + $0x20] sm:$0xff] %v973
        %1006 = vst [vmem:[%s191 + $0x28] sm:$0xff] %v974
        %1007 = vst [vmem:[%s191 + $0x30] sm:$0xff] %v975
        %1008 = vst [vmem:[%s191 + $0x38] sm:$0xff] %v976
        %1009 = vst [vmem:[%s191 + $0x40] sm:$0xff] %v977
        %1010 = vst [vmem:[%s191 + $0x48] sm:$0xff] %v978
        %1011 = vst [vmem:[%s191 + $0x50] sm:$0xff] %v979
        %1012 = vst [vmem:[%s191 + $0x58] sm:$0xff] %v980
        %1013 = vst [vmem:[%s191 + $0x60] sm:$0xff] %v981
        %1014 = vst [vmem:[%s191 + $0x68] sm:$0xff] %v982
        %1015 = vst [vmem:[%s191 + $0x70] sm:$0xff] %v983
        %1016 = vst [vmem:[%s191 + $0x78] sm:$0xff] %v984
        %1017 = vst [vmem:[%s191 + $0x80] sm:$0xff] %v985
        %1018 = vst [vmem:[%s191 + $0x88] sm:$0xff] %v986
        %1019 = vst [vmem:[%s191 + $0x90] sm:$0xff] %v987
        %1020 = vst [vmem:[%s191 + $0x98] sm:$0xff] %v988
        %1021 = vst [vmem:[%s191 + $0xa0] sm:$0xff] %v989
        %1022 = vst [vmem:[%s191 + $0xa8] sm:$0xff] %v990
        %1023 = vst [vmem:[%s191 + $0xb0] sm:$0xff] %v991
        %1024 = vst [vmem:[%s191 + $0xb8] sm:$0xff] %v992
        %1025 = vst [vmem:[%s191 + $0xc0] sm:$0xff] %v993
        %1026 = vst [vmem:[%s191 + $0xc8] sm:$0xff] %v994
        %1027 = vst [vmem:[%s191 + $0xd0] sm:$0xff] %v995
        %1028 = vst [vmem:[%s191 + $0xd8] sm:$0xff] %v996
        %1029 = vst [vmem:[%s191 + $0xe0] sm:$0xff] %v997
        %1030 = vst [vmem:[%s191 + $0xe8] sm:$0xff] %v998
        %1031 = vst [vmem:[%s191 + $0xf0] sm:$0xff] %v999
        %1032 = vst [vmem:[%s191 + $0xf8] sm:$0xff] %v1000
        %s1033 = sand.u32 %s115, 1
        %s1034 = scalar_lea.sflag [#allocation3], %s1033
        %s1035 = sand.u32 %s115, 1
        %s1036 = smul.addr %s1035, 256
        %s1037 = scalar_lea.vmem [#allocation2], %s1036
        // Predicated region
        $region37: #{tpu_custom_call.1} parent=35 // pred_check
          %p1038 = pneg %p125
        $region38: #{tpu_custom_call.1} parent=35 // pred_check_branch
          %1040 = sbr.rel (%p1038) target = $region40
        $region39: #{tpu_custom_call.1} parent=35 // pred_region
          %s1041 = smul.u32 16, %s18
          %s1043 = ssub.s32 4096, 4096
          %1044 = vsyncadd %s1034, %s1043
          %s1045 = smul.addr %s1041, 2
          %s1046 = smul.addr %s1045, 128
          %s1047 = scalar_lea.hbm %s4, %s1046
          %s1048 = sshll.u32 %s1037, 4
          %s1049 = int_to_ptr.vmem [resolvable:$true] %s1048
          %1054 = dma.vmem_to_hbm [thread:$0]  %s1049, 4096, %s1047, %s1034, 256, 256, 16
        $region40: #{tpu_custom_call.1} parent=35 // pred_fallthru
          _
      $region36: #{tpu_custom_call.1} parent=5 // pred_fallthru
        _
      %p1055 = scmp.le.s32.totalorder 2, %s13
      // Predicated region
      $region41: #{tpu_custom_call.1} parent=5 // pred_check
        %p1056 = pneg %p1055
      $region42: #{tpu_custom_call.1} parent=5 // pred_check_branch
        %1058 = sbr.rel (%p1056) target = $region44
      $region43: #{tpu_custom_call.1} parent=5 // pred_region
        %s1059 = ssub.s32 %s13, 2
        // Predicated region
        $region45: #{tpu_custom_call.1} parent=43 // pred_check
          %p1060 = pneg %p131
        $region46: #{tpu_custom_call.1} parent=43 // pred_check_branch
          %1062 = sbr.rel (%p1060) target = $region48
        $region47: #{tpu_custom_call.1} parent=43 // pred_region
          %s1063 = sand.u32 %s116, 1
          %s1064 = scalar_lea.sflag [#allocation3], %s1063
          %s1065 = sand.u32 %s116, 1
          %s1066 = smul.addr %s1065, 256
          %s1067 = scalar_lea.vmem [#allocation2], %s1066
          %1068 = dma.done %s1064, 4096
        $region48: #{tpu_custom_call.1} parent=43 // pred_fallthru
          _
      $region44: #{tpu_custom_call.1} parent=5 // pred_fallthru
        _
    $region6: #{tpu_custom_call.1} parent=1 // loop_footer
      %s17 = sadd.s32 1, %s13
    $region7: #{tpu_custom_call.1} parent=1 // loop_footer_branch
      %12 = sbr.rel target = $region3
    $region8: #{tpu_custom_call.1} parent=1 // loop_exit
      _
    %1069 = vsyncpa [#allocation3], 1
    %s1070 = scalar_lea.sflag [#allocation3], 1
    %1071 = vsyncpa %s1070, 1

</llo_original>
